<compile_context>
chip_gen: v5e
topology: v5e:2x2
jax: 0.10.0
libtpu: 0.0.40
codegen_flags: <defaults>
</compile_context>

<pallas_src>
import functools

import jax
import jax.numpy as jnp
from jax.experimental import pallas as pl
from jax.experimental.pallas import tpu as pltpu


_LANE_W = 512      # lane-dense slab width (multiple of 128 -> unmasked vst)
_MAX_TILE_M = 1024  # rows per grid step: 1024*512*4 B = 2 MiB per buffer


def _linreg_kernel(w_ref, b_ref, x_ref, o_ref):
    # w_ref / b_ref: (1,) f32 scalars in SMEM; x_ref / o_ref: (tile_m, 512) VMEM tiles.
    w = w_ref[0]
    b = b_ref[0]
    y = x_ref[...].astype(jnp.float32) * w + b   # plain VPU FMA on whole vregs
    o_ref[...] = y.astype(o_ref.dtype)


def _call_slab(x_slab, w, b, *, alias_input):
    """Run the FMA kernel over a lane-dense (rows, _LANE_W) slab."""
    rows = x_slab.shape[0]
    if rows <= 8:
        tile_m = rows                       # single full-extent block
    else:
        half = (rows + 1) // 2              # aim for >= 2 tiles (v7x: one per TC)
        tile_m = min(_MAX_TILE_M, ((half + 7) // 8) * 8)
    num_tiles = pl.cdiv(rows, tile_m)       # ragged last block is write-masked

    tile_bytes = tile_m * _LANE_W * jnp.dtype(x_slab.dtype).itemsize
    # 2 double-buffered streams (in + out) = 4 buffers; 2x headroom, >= 16 MiB,
    # capped well under v7x's 64 MiB physical VMEM.
    vmem_limit = int(min(48 * 1024 * 1024, max(16 * 1024 * 1024, 8 * tile_bytes)))

    extra = {"input_output_aliases": {2: 0}} if alias_input else {}
    return pl.pallas_call(
        _linreg_kernel,
        out_shape=jax.ShapeDtypeStruct(x_slab.shape, x_slab.dtype),
        grid=(num_tiles,),
        in_specs=[
            pl.BlockSpec(memory_space=pltpu.MemorySpace.SMEM),   # weights (1,) f32
            pl.BlockSpec(memory_space=pltpu.MemorySpace.SMEM),   # bias    (1,) f32
            pl.BlockSpec((tile_m, _LANE_W), lambda i: (i, 0)),   # x tile
        ],
        out_specs=pl.BlockSpec((tile_m, _LANE_W), lambda i: (i, 0)),
        compiler_params=pltpu.CompilerParams(
            dimension_semantics=("parallel",),   # shard row tiles across TCs on v7x
            vmem_limit_bytes=vmem_limit,
        ),
        **extra,
    )(w, b, x_slab)


@jax.jit
def linear_regression_forward(x, weights, bias):
    """Pallas forward of `weights * x + bias` (scalar broadcast), any x shape."""
    assert weights.shape == (1,), "weights must be shape (1,) like nn.Parameter(randn(1))"
    assert bias.shape == (1,), "bias must be shape (1,)"

    orig_shape = x.shape
    n_total = x.size
    if n_total == 0:
        return x

    w = weights.astype(jnp.float32)
    b = bias.astype(jnp.float32)

    if n_total % _LANE_W == 0:
        # Fast path: ravel/reshape of a contiguous array is a bitcast -> no
        # extra HBM traffic; kernel does the minimal 1 read + 1 write.
        rows = n_total // _LANE_W
        x_slab = jnp.reshape(x, (rows, _LANE_W))
        out_slab = _call_slab(x_slab, w, b, alias_input=False)
        return jnp.reshape(out_slab, orig_shape)

    # Ragged-tail fallback (size not divisible by the lane width): pad the tail
    # up to one full lane row. This is the only path that still materializes a
    # padded copy of x; the pad amount itself is < _LANE_W elements.
    # TODO(synk): could drop this copy entirely with a manual-DMA 1-D gather of
    # the tail, but it is not worth the complexity for a scalar FMA.
    rows = pl.cdiv(n_total, _LANE_W)
    padded = rows * _LANE_W
    x_slab = jnp.pad(jnp.ravel(x), (0, padded - n_total)).reshape(rows, _LANE_W)
    out_slab = _call_slab(x_slab, w, b, alias_input=True)  # slab is a fresh temp
    return jnp.reshape(out_slab, (-1,))[:n_total].reshape(orig_shape)


if __name__ == "__main__":
    key = jax.random.PRNGKey(0)
    k_w, k_b, k_x, k_x2, k_x3 = jax.random.split(key, 5)

    # Parameters: same shapes as the nn.Module (__init__: randn(1) each).
    weights = jax.random.normal(k_w, (1,), dtype=jnp.float32)
    bias = jax.random.normal(k_b, (1,), dtype=jnp.float32)

    # 1) Tiny (N, 1) feature column (ragged path).
    x = jax.random.normal(k_x, (16, 1), dtype=jnp.float32)
    y = jax.block_until_ready(linear_regression_forward(x, weights, bias))
    y_ref = weights * x + bias
    assert y.shape == x.shape and y.dtype == x.dtype
    assert jnp.allclose(y, y_ref, atol=1e-6, rtol=1e-6)

    # 2) Ragged length exercising the pad/unpad fallback path.
    x2 = jax.random.normal(k_x2, (1000, 1), dtype=jnp.float32)
    y2 = jax.block_until_ready(linear_regression_forward(x2, weights, bias))
    y2_ref = weights * x2 + bias
    assert y2.shape == x2.shape and y2.dtype == x2.dtype
    assert jnp.allclose(y2, y2_ref, atol=1e-6, rtol=1e-6)

    # 3) Lane-aligned length exercising the zero-copy fast path + 2-tile grid.
    x3 = jax.random.normal(k_x3, (8192, 1), dtype=jnp.float32)
    y3 = jax.block_until_ready(linear_regression_forward(x3, weights, bias))
    y3_ref = weights * x3 + bias
    assert y3.shape == x3.shape and y3.dtype == x3.dtype
    assert jnp.allclose(y3, y3_ref, atol=1e-6, rtol=1e-6)

    print("KERNEL_OK")
</pallas_src>

<mosaic_0001>
module attributes {stable_mosaic.version = 11 : i64} {
  func.func @_linreg_kernel(%arg0: i32, %arg1: memref<1xf32, #tpu.memory_space<smem>>, %arg2: memref<1xf32, #tpu.memory_space<smem>>, %arg3: memref<1x512xf32, #tpu.memory_space<vmem>>, %arg4: memref<1x512xf32, #tpu.memory_space<vmem>>) attributes {dimension_semantics = [#tpu.dimension_semantics<parallel>], iteration_bounds = array<i64: 1>, scalar_prefetch = 0 : i64, scratch_operands = 0 : i64, tpu.core_type = #tpu.core_type<tc>, window_params = [{transform_indices = @transform_0, window_bounds = array<i64: 1>}, {transform_indices = @transform_1, window_bounds = array<i64: 1>}, {transform_indices = @transform_2, window_bounds = array<i64: 1, 512>}, {transform_indices = @transform_3, window_bounds = array<i64: 1, 512>}]} {
    %c0 = arith.constant 0 : index
    %0 = memref.load %arg1[%c0] : memref<1xf32, #tpu.memory_space<smem>>
    %c0_0 = arith.constant 0 : index
    %1 = memref.load %arg2[%c0_0] : memref<1xf32, #tpu.memory_space<smem>>
    %c0_1 = arith.constant 0 : index
    %c0_2 = arith.constant 0 : index
    %2 = vector.load %arg3[%c0_1, %c0_2] : memref<1x512xf32, #tpu.memory_space<vmem>>, vector<1x512xf32>
    %3 = vector.broadcast %0 : f32 to vector<1x512xf32>
    %4 = arith.mulf %2, %3 : vector<1x512xf32>
    %5 = vector.broadcast %1 : f32 to vector<1x512xf32>
    %6 = arith.addf %4, %5 : vector<1x512xf32>
    %c0_3 = arith.constant 0 : index
    %c0_4 = arith.constant 0 : index
    %7 = vector.load %arg4[%c0_3, %c0_4] : memref<1x512xf32, #tpu.memory_space<vmem>>, vector<1x512xf32>
    tpu.vector_store %arg4[%c0_3, %c0_4], %6 {strides = array<i32>} : memref<1x512xf32, #tpu.memory_space<vmem>>, vector<1x512xf32>,
    return
  }
  func.func @transform_0(%arg0: i32) -> i32 {
    %c0_i32 = arith.constant 0 : i32
    %c0_i32_0 = arith.constant 0 : i32
    return %c0_i32 : i32
  }
  func.func @transform_1(%arg0: i32) -> i32 {
    %c0_i32 = arith.constant 0 : i32
    %c0_i32_0 = arith.constant 0 : i32
    return %c0_i32 : i32
  }
  func.func @transform_2(%arg0: i32) -> (i32, i32) {
    %c0_i32 = arith.constant 0 : i32
    %c0_i32_0 = arith.constant 0 : i32
    return %arg0, %c0_i32 : i32, i32
  }
  func.func @transform_3(%arg0: i32) -> (i32, i32) {
    %c0_i32 = arith.constant 0 : i32
    %c0_i32_0 = arith.constant 0 : i32
    return %arg0, %c0_i32 : i32, i32
  }
}

</mosaic_0001>

<llo_original>
// kernel: linear_regression_forward.1
$region0: #{linear_regression_forward.1}
  #allocation0 [shape = 'u32[]', space=smem, size = 0x4, offset = 0x4, fixed_abs, tag = 'smem constant byte address 0x4 - core index']
  #allocation1 [shape = 'u32[72,128]{1,0:T(1,128)}', space=vmem, size = 0x9000, scoped, tag = 'internal scratch']
  #allocation2 [shape = 'f32[1]{0:T(128)S(6)}', space=smem, size = 0x200, scoped, tag = 'scoped memory for linear_regression_forward.1']
  #allocation3 [shape = 'f32[1]{0:T(128)S(6)}', space=smem, size = 0x200, scoped, tag = 'scoped memory for linear_regression_forward.1']
  %s0 = inlined_call_operand.<no memory space> [shape: f32[1], index: 0, kind: input, shape index: {}]
  %s1 = inlined_call_operand.<no memory space> [shape: f32[1], index: 1, kind: input, shape index: {}]
  %s2 = inlined_call_operand.vmem [shape: f32[1,512], index: 2, kind: input, shape index: {}, may-alias: {2,3}]
  %s3 = inlined_call_operand.vmem [shape: f32[1,512], index: 3, kind: output, shape index: {}, may-alias: {2,3}]
  %s4 = sld [smem:[#allocation0]]
  $region22: #{linear_regression_forward.1} parent=0
    _
  %s6 = ssub.s32 1, %s4
  %s7 = scalar_select 0, %s6, %s4
  %8 = sst [smem:[#allocation2]] %s0
  %9 = sst [smem:[#allocation3]] %s1
  // Predicated region
  $region2: #{linear_regression_forward.1} parent=0 // pred_check
    _
  $region3: #{linear_regression_forward.1} parent=0 // pred_check_branch
    %11 = sbr.rel (0) target = $region5
  $region4: #{linear_regression_forward.1} parent=0 // pred_region
    _
  $region5: #{linear_regression_forward.1} parent=0 // pred_fallthru
    _
  // Predicated region
  $region6: #{linear_regression_forward.1} parent=0 // pred_check
    _
  $region7: #{linear_regression_forward.1} parent=0 // pred_check_branch
    %13 = sbr.rel (0) target = $region9
  $region8: #{linear_regression_forward.1} parent=0 // pred_region
    _
  $region9: #{linear_regression_forward.1} parent=0 // pred_fallthru
    _
  // Predicated region
  $region10: #{linear_regression_forward.1} parent=0 // pred_check
    _
  $region11: #{linear_regression_forward.1} parent=0 // pred_check_branch
    %15 = sbr.rel (0) target = $region13
  $region12: #{linear_regression_forward.1} parent=0 // pred_region
    _
  $region13: #{linear_regression_forward.1} parent=0 // pred_fallthru
    _
  %s16 = sld [smem:[#allocation2]]
  %s17 = sld [smem:[#allocation3]]
  %v18 = vld [vmem:[%s2] sm:$0xf]
  %v19 = vstv %s16
  %v20 = vmul.f32 %v18, %v19
  %v21 = vstv %s17
  %v22 = vadd.f32 %v20, %v21
  %v23 = vlaneseq
  %vm24 = vcmp.ge.s32.totalorder %v23, 0
  %vm25 = vcmp.lt.s32.totalorder %v23, 512
  %vm26 = vmand %vm24, %vm25
  %27 = vst.msk [vmem:[%s3] sm:$0xf] %vm26, %v22
  // Predicated region
  $region14: #{linear_regression_forward.1} parent=0 // pred_check
    _
  $region15: #{linear_regression_forward.1} parent=0 // pred_check_branch
    %29 = sbr.rel (0) target = $region17
  $region16: #{linear_regression_forward.1} parent=0 // pred_region
    _
  $region17: #{linear_regression_forward.1} parent=0 // pred_fallthru
    _
  // Predicated region
  $region18: #{linear_regression_forward.1} parent=0 // pred_check
    _
  $region19: #{linear_regression_forward.1} parent=0 // pred_check_branch
    %31 = sbr.rel (0) target = $region21
  $region20: #{linear_regression_forward.1} parent=0 // pred_region
    _
  $region21: #{linear_regression_forward.1} parent=0 // pred_fallthru
    _

</llo_original>
